<compile_context>
chip_gen: v6e
topology: v6e:2x2x1
jax: 0.10.0
libtpu: 0.0.40
codegen_flags: <defaults>
</compile_context>

<pallas_src>
import functools

import jax
import jax.numpy as jnp
from jax.experimental import pallas as pl
from jax.experimental.pallas import tpu as pltpu

_LANE = 128        # lane width (last-dim alignment)
_MASK = -1e30      # bias for padded class columns -> softmax weight exactly 0
_APPROX_RECIP = True


def _round_up(x, m):
    return (x + m - 1) // m * m


def _vmem_capacity_bytes():
    try:
        info = pltpu.get_tpu_info()
        cap = getattr(info, "vmem_capacity_bytes", None)
        if cap:
            return int(cap)
    except Exception:
        pass
    return 64 << 20  # conservative fallback (v7x per-TensorCore VMEM)


def _pick_tile_m(n, c_in, c_mid_pad, c_out_pad, emit_feats,
                 w_bytes, out_bytes, row_align):
    """Largest row tile whose working set fits ~75% of VMEM.

    Streaming tiles (x in, preds/feats out) are double-buffered; pinned
    weights/biases are counted once (single-buffered); f32 in-kernel
    temporaries (logits + exp, plus the live fc1 result) are counted once.
    """
    cap = _vmem_capacity_bytes()
    budget = int(cap * 0.75)

    if c_mid_pad is not None:
        w_resident = ((c_in * c_mid_pad + c_mid_pad * c_out_pad) * w_bytes
                      + (c_mid_pad + c_out_pad) * 4)
    else:
        w_resident = c_in * c_out_pad * w_bytes + c_out_pad * 4

    def est(tm):
        stream = tm * c_in * 4 + tm * c_out_pad * out_bytes
        tmp = 2 * tm * c_out_pad * 4                 # f32 logits + exp temps
        if c_mid_pad is not None:
            tmp += tm * c_mid_pad * 4                # fc1 result live for fc2
            if emit_feats:
                stream += tm * c_mid_pad * out_bytes
        return 2 * stream + w_resident + tmp

    tm = row_align
    for cand in (4096, 2048, 1024, 512, 256, 128, 64, 32, 16):
        if est(cand) <= budget:
            tm = cand
            break
    tm = max(row_align, min(tm, _round_up(n, row_align)))
    vmem_limit = int(min(cap, est(tm) + (16 << 20)))
    return tm, vmem_limit


def _pick_tiles_2d(n, c_in, c_out_pad, w_bytes, out_bytes, row_align):
    """Row/class tiles for the no-softmax single-FC path."""
    cap = _vmem_capacity_bytes()
    budget = int(cap * 0.75)

    tn = _LANE
    for cand in (2048, 1024, 512, 256, 128):
        if c_out_pad % cand == 0:
            tn = cand
            break

    def est(tm):
        stream = (tm * c_in * 4 + tm * tn * out_bytes
                  + c_in * tn * w_bytes + tn * 4)
        return 2 * stream + tm * tn * 4              # + f32 logits temp

    tm = row_align
    for cand in (4096, 2048, 1024, 512, 256, 128, 64, 32, 16):
        if est(cand) <= budget:
            tm = cand
            break
    tm = max(row_align, min(tm, _round_up(n, row_align)))
    vmem_limit = int(min(cap, est(tm) + (16 << 20)))
    return tm, tn, vmem_limit


# --------------------------------------------------------------------------
# Kernels
# --------------------------------------------------------------------------
def _softmax_lastdim(logits):
    m = jnp.max(logits, axis=-1, keepdims=True)
    e = jnp.exp(logits - m)
    denom = jnp.sum(e, axis=-1, keepdims=True)
    return e * pl.reciprocal(denom, approx=_APPROX_RECIP)


def _fc_kernel(x_ref, w_ref, b_ref, o_ref, *, apply_softmax, compute_dtype):
    # x: (TM, C_in) f32, w: (C_in, C_out_tile) compute_dtype, b: (1, C_out_tile) f32
    x = x_ref[...].astype(compute_dtype)
    logits = jnp.dot(x, w_ref[...],
                     preferred_element_type=jnp.float32) + b_ref[...]
    out = _softmax_lastdim(logits) if apply_softmax else logits
    o_ref[...] = out.astype(o_ref.dtype)


def _fused_fc2_kernel(x_ref, w1_ref, b1_ref, w2_ref, b2_ref, *out_refs,
                      apply_softmax, emit_feats, compute_dtype):
    # fc1 -> (optional feats store) -> fc2 -> (optional softmax), all in VMEM.
    x = x_ref[...].astype(compute_dtype)
    feats = jnp.dot(x, w1_ref[...],
                    preferred_element_type=jnp.float32) + b1_ref[...]
    if emit_feats:
        out_refs[0][...] = feats.astype(out_refs[0].dtype)
    logits = jnp.dot(feats.astype(compute_dtype), w2_ref[...],
                     preferred_element_type=jnp.float32) + b2_ref[...]
    out = _softmax_lastdim(logits) if apply_softmax else logits
    out_refs[-1][...] = out.astype(out_refs[-1].dtype)


# --------------------------------------------------------------------------
# pallas_call wrappers
# --------------------------------------------------------------------------
def _call_with_weight_buffering(build_fn):
    """Try single-buffered pinned weights first; fall back to default specs."""
    try:
        return build_fn(True)
    except Exception:
        return build_fn(False)


def _single_fc_pallas(x2d, w, b2d, *, apply_softmax, tm, vmem_limit,
                      out_dtype, compute_dtype):
    n, c_in = x2d.shape
    c_out_pad = w.shape[1]
    kernel = functools.partial(_fc_kernel, apply_softmax=apply_softmax,
                               compute_dtype=compute_dtype)

    def build(single_buffer):
        pin = dict(pipeline_mode=pl.Buffered(1)) if single_buffer else {}
        return pl.pallas_call(
            kernel,
            out_shape=jax.ShapeDtypeStruct((n, c_out_pad), out_dtype),
            grid_spec=pltpu.PrefetchScalarGridSpec(
                num_scalar_prefetch=0,
                grid=(pl.cdiv(n, tm),),
                in_specs=[
                    pl.BlockSpec((tm, c_in), lambda i: (i, 0)),
                    pl.BlockSpec((c_in, c_out_pad), lambda i: (0, 0), **pin),
                    pl.BlockSpec((1, c_out_pad), lambda i: (0, 0), **pin),
                ],
                out_specs=pl.BlockSpec((tm, c_out_pad), lambda i: (i, 0)),
            ),
            compiler_params=pltpu.CompilerParams(
                dimension_semantics=("parallel",),
                vmem_limit_bytes=vmem_limit),
        )(x2d, w, b2d)

    return _call_with_weight_buffering(build)


def _single_fc_logits_2d(x2d, w, b2d, *, tm, tn, vmem_limit,
                         out_dtype, compute_dtype):
    """No-softmax (training / logits) path: 2-D grid over rows x class tiles."""
    n, c_in = x2d.shape
    c_out_pad = w.shape[1]
    kernel = functools.partial(_fc_kernel, apply_softmax=False,
                               compute_dtype=compute_dtype)
    return pl.pallas_call(
        kernel,
        out_shape=jax.ShapeDtypeStruct((n, c_out_pad), out_dtype),
        grid_spec=pltpu.PrefetchScalarGridSpec(
            num_scalar_prefetch=0,
            grid=(pl.cdiv(n, tm), c_out_pad // tn),
            in_specs=[
                pl.BlockSpec((tm, c_in), lambda i, j: (i, 0)),
                pl.BlockSpec((c_in, tn), lambda i, j: (0, j)),
                pl.BlockSpec((1, tn), lambda i, j: (0, j)),
            ],
            out_specs=pl.BlockSpec((tm, tn), lambda i, j: (i, j)),
        ),
        compiler_params=pltpu.CompilerParams(
            dimension_semantics=("parallel", "parallel"),
            vmem_limit_bytes=vmem_limit),
    )(x2d, w, b2d)


def _fused_fc2_pallas(x2d, w1, b1_2d, w2, b2_2d, *, apply_softmax,
                      emit_feats, tm, vmem_limit, out_dtype, compute_dtype):
    n, c_in = x2d.shape
    c_mid_pad = w1.shape[1]
    c_out_pad = w2.shape[1]
    kernel = functools.partial(_fused_fc2_kernel,
                               apply_softmax=apply_softmax,
                               emit_feats=emit_feats,
                               compute_dtype=compute_dtype)
    if emit_feats:
        out_shape = (jax.ShapeDtypeStruct((n, c_mid_pad), out_dtype),
                     jax.ShapeDtypeStruct((n, c_out_pad), out_dtype))
        out_specs = [pl.BlockSpec((tm, c_mid_pad), lambda i: (i, 0)),
                     pl.BlockSpec((tm, c_out_pad), lambda i: (i, 0))]
    else:
        out_shape = jax.ShapeDtypeStruct((n, c_out_pad), out_dtype)
        out_specs = pl.BlockSpec((tm, c_out_pad), lambda i: (i, 0))

    def build(single_buffer):
        pin = dict(pipeline_mode=pl.Buffered(1)) if single_buffer else {}
        return pl.pallas_call(
            kernel,
            out_shape=out_shape,
            grid_spec=pltpu.PrefetchScalarGridSpec(
                num_scalar_prefetch=0,
                grid=(pl.cdiv(n, tm),),
                in_specs=[
                    pl.BlockSpec((tm, c_in), lambda i: (i, 0)),
                    pl.BlockSpec((c_in, c_mid_pad), lambda i: (0, 0), **pin),
                    pl.BlockSpec((1, c_mid_pad), lambda i: (0, 0), **pin),
                    pl.BlockSpec((c_mid_pad, c_out_pad), lambda i: (0, 0), **pin),
                    pl.BlockSpec((1, c_out_pad), lambda i: (0, 0), **pin),
                ],
                out_specs=out_specs,
            ),
            compiler_params=pltpu.CompilerParams(
                dimension_semantics=("parallel",),
                vmem_limit_bytes=vmem_limit),
        )(x2d, w1, b1_2d, w2, b2_2d)

    out = _call_with_weight_buffering(build)
    if emit_feats:
        return out[0], out[1]
    return None, out


# --------------------------------------------------------------------------
# Module port
# --------------------------------------------------------------------------
class CTCHeadPallas:
    """JAX/Pallas port of the PyTorch CTCHead (forward pass only)."""

    def __init__(self, in_channels, out_channels, mid_channels=None,
                 return_feats=False, *, key,
                 compute_dtype=jnp.bfloat16, out_dtype=jnp.bfloat16):
        self.in_channels = in_channels
        self.out_channels = out_channels
        self.mid_channels = mid_channels
        self.return_feats = return_feats
        self.compute_dtype = compute_dtype   # MXU operand / stored weight dtype
        self.out_dtype = out_dtype           # predicts / feats HBM dtype
        self.training = False  # mimic nn.Module.eval() default for inference

        self._c_out_pad = _round_up(out_channels, _LANE)

        if mid_channels is None:
            k0, k1 = jax.random.split(key, 2)
            bound = 1.0 / (in_channels ** 0.5)
            # nn.Linear stores (out, in); we keep (in, out) for x @ W.
            self.fc_w = jax.random.uniform(
                k0, (in_channels, out_channels), jnp.float32, -bound, bound)
            self.fc_b = jax.random.uniform(
                k1, (out_channels,), jnp.float32, -bound, bound)
            opad = self._c_out_pad - out_channels
            # Padded class columns: zero weights + -1e30 bias -> softmax == 0.
            self._w_pad = jnp.pad(
                self.fc_w, ((0, 0), (0, opad))).astype(compute_dtype)
            self._b_pad = jnp.pad(self.fc_b, (0, opad),
                                  constant_values=_MASK).reshape(1, -1)
            self._c_mid_pad = None
        else:
            k0, k1, k2, k3 = jax.random.split(key, 4)
            b1 = 1.0 / (in_channels ** 0.5)
            b2 = 1.0 / (mid_channels ** 0.5)
            self.fc1_w = jax.random.uniform(
                k0, (in_channels, mid_channels), jnp.float32, -b1, b1)
            self.fc1_b = jax.random.uniform(
                k1, (mid_channels,), jnp.float32, -b1, b1)
            self.fc2_w = jax.random.uniform(
                k2, (mid_channels, out_channels), jnp.float32, -b2, b2)
            self.fc2_b = jax.random.uniform(
                k3, (out_channels,), jnp.float32, -b2, b2)
            self._c_mid_pad = _round_up(mid_channels, _LANE)
            mpad = self._c_mid_pad - mid_channels
            opad = self._c_out_pad - out_channels
            # Padded mid columns are exactly 0 (zero weight cols + zero bias),
            # and the matching w2 rows are zero, so fc2 results are unchanged.
            self._w1_pad = jnp.pad(
                self.fc1_w, ((0, 0), (0, mpad))).astype(compute_dtype)
            self._b1_pad = jnp.pad(self.fc1_b, (0, mpad)).reshape(1, -1)
            self._w2_pad = jnp.pad(
                self.fc2_w, ((0, mpad), (0, opad))).astype(compute_dtype)
            self._b2_pad = jnp.pad(self.fc2_b, (0, opad),
                                   constant_values=_MASK).reshape(1, -1)

    def __call__(self, x, targets=None):
        # x: (B, T, C_in) float32; softmax over dim=2 (classes) in eval mode.
        B, T, C = x.shape
        assert C == self.in_channels
        apply_softmax = not self.training
        n = B * T
        x2d = x.reshape(n, C)

        out_bytes = jnp.dtype(self.out_dtype).itemsize
        w_bytes = jnp.dtype(self.compute_dtype).itemsize
        row_align = 16 if out_bytes < 4 else 8

        emit_feats = self.return_feats and self.mid_channels is not None

        if self.mid_channels is None:
            if apply_softmax:
                tm, vmem_limit = _pick_tile_m(
                    n, C, None, self._c_out_pad, False,
                    w_bytes, out_bytes, row_align)
                preds_pad = _single_fc_pallas(
                    x2d, self._w_pad, self._b_pad,
                    apply_softmax=True, tm=tm, vmem_limit=vmem_limit,
                    out_dtype=self.out_dtype, compute_dtype=self.compute_dtype)
            else:
                tm, tn, vmem_limit = _pick_tiles_2d(
                    n, C, self._c_out_pad, w_bytes, out_bytes, row_align)
                preds_pad = _single_fc_logits_2d(
                    x2d, self._w_pad, self._b_pad,
                    tm=tm, tn=tn, vmem_limit=vmem_limit,
                    out_dtype=self.out_dtype, compute_dtype=self.compute_dtype)
            feats = x  # PyTorch: feats is the (unmodified) head input
        else:
            tm, vmem_limit = _pick_tile_m(
                n, C, self._c_mid_pad, self._c_out_pad, emit_feats,
                w_bytes, out_bytes, row_align)
            feats_pad, preds_pad = _fused_fc2_pallas(
                x2d, self._w1_pad, self._b1_pad, self._w2_pad, self._b2_pad,
                apply_softmax=apply_softmax, emit_feats=emit_feats,
                tm=tm, vmem_limit=vmem_limit,
                out_dtype=self.out_dtype, compute_dtype=self.compute_dtype)
            if emit_feats:
                if self._c_mid_pad != self.mid_channels:
                    feats_pad = feats_pad[:, :self.mid_channels]
                feats = feats_pad.reshape(B, T, self.mid_channels)
            else:
                feats = None

        predicts = preds_pad
        # Keep the module's public (B, T, out_channels) contract; the slice is
        # a no-op when out_channels is already a multiple of 128.
        if self._c_out_pad != self.out_channels:
            predicts = predicts[:, :self.out_channels]
        predicts = predicts.reshape(B, T, self.out_channels)
        if self.return_feats:
            return (feats, predicts)
        return predicts


def _reference(x, head):
    # plain-JAX f32 reference for a numeric sanity check
    if head.mid_channels is None:
        logits = x @ head.fc_w + head.fc_b
        feats = x
    else:
        feats = x @ head.fc1_w + head.fc1_b
        logits = feats @ head.fc2_w + head.fc2_b
    preds = jax.nn.softmax(logits, axis=2) if not head.training else logits
    return (feats, preds) if head.return_feats else preds


if __name__ == "__main__":
    key = jax.random.PRNGKey(0)
    k_x1, k_x2, k_p1, k_p2, k_p3 = jax.random.split(key, 5)

    # Path 1: single fc (mid_channels=None), eval-mode softmax, bf16 output.
    # out_channels=64 exercises class padding to the 128-lane boundary.
    B, T, C_IN, C_OUT = 2, 8, 32, 64
    x = jax.random.normal(k_x1, (B, T, C_IN), jnp.float32)
    head = CTCHeadPallas(C_IN, C_OUT, mid_channels=None,
                         return_feats=False, key=k_p1)
    out = jax.block_until_ready(head(x))
    ref = _reference(x, head)
    assert out.shape == (B, T, C_OUT)
    assert out.dtype == jnp.bfloat16
    out_f = out.astype(jnp.float32)
    assert jnp.allclose(out_f, ref, atol=2e-2, rtol=2e-2)
    assert jnp.allclose(jnp.sum(out_f, axis=2), 1.0, atol=3e-2)

    # Path 2: fused fc1 -> fc2 -> softmax with return_feats; B*T=14 exercises
    # the ragged row tail (masked final store), C_MID=48 / C_OUT=96 exercise
    # lane padding of the mid and class axes.
    B2, T2, C_MID, C_OUT2 = 2, 7, 48, 96
    x2 = jax.random.normal(k_x2, (B2, T2, C_IN), jnp.float32)
    head2 = CTCHeadPallas(C_IN, C_OUT2, mid_channels=C_MID,
                          return_feats=True, key=k_p2)
    feats, preds = head2(x2)
    feats = jax.block_until_ready(feats)
    preds = jax.block_until_ready(preds)
    rfeats, rpreds = _reference(x2, head2)
    assert feats.shape == (B2, T2, C_MID) and preds.shape == (B2, T2, C_OUT2)
    assert jnp.allclose(feats.astype(jnp.float32), rfeats, atol=3e-2, rtol=3e-2)
    assert jnp.allclose(preds.astype(jnp.float32), rpreds, atol=2e-2, rtol=2e-2)
    assert jnp.allclose(jnp.sum(preds.astype(jnp.float32), axis=2), 1.0,
                        atol=3e-2)

    # Path 3: training-mode logits (no softmax) on the single fc -> exercises
    # the 2-D row x class-tile grid (out_channels=300 -> 384 padded -> 3 tiles).
    head3 = CTCHeadPallas(C_IN, 300, mid_channels=None,
                          return_feats=False, key=k_p3)
    head3.training = True
    logits = jax.block_until_ready(head3(x))
    rlogits = _reference(x, head3)
    assert logits.shape == (B, T, 300)
    assert jnp.allclose(logits.astype(jnp.float32), rlogits,
                        atol=3e-2, rtol=3e-2)

    print("KERNEL_OK")
</pallas_src>

<mosaic_0001>
module attributes {stable_mosaic.version = 11 : i64} {
  func.func @_fc_kernel(%arg0: i32, %arg1: memref<16x32xf32, #tpu.memory_space<vmem>>, %arg2: memref<32x128xbf16, #tpu.memory_space<vmem>>, %arg3: memref<1x128xf32, #tpu.memory_space<vmem>>, %arg4: memref<16x128xbf16, #tpu.memory_space<vmem>>) attributes {dimension_semantics = [#tpu.dimension_semantics<parallel>], iteration_bounds = array<i64: 1>, scalar_prefetch = 0 : i64, scratch_operands = 0 : i64, tpu.core_type = #tpu.core_type<tc>, window_params = [{transform_indices = @transform_0, window_bounds = array<i64: 16, 32>}, {pipeline_mode = #tpu.pipeline_mode<synchronous>, transform_indices = @transform_1, window_bounds = array<i64: 32, 128>}, {pipeline_mode = #tpu.pipeline_mode<synchronous>, transform_indices = @transform_2, window_bounds = array<i64: 1, 128>}, {transform_indices = @transform_3, window_bounds = array<i64: 16, 128>}]} {
    %c0 = arith.constant 0 : index
    %c0_0 = arith.constant 0 : index
    %0 = vector.load %arg1[%c0, %c0_0] : memref<16x32xf32, #tpu.memory_space<vmem>>, vector<16x32xf32>
    %1 = arith.truncf %0 : vector<16x32xf32> to vector<16x32xbf16>
    %c0_1 = arith.constant 0 : index
    %c0_2 = arith.constant 0 : index
    %2 = vector.load %arg2[%c0_1, %c0_2] : memref<32x128xbf16, #tpu.memory_space<vmem>>, vector<32x128xbf16>
    %cst = arith.constant dense<0.000000e+00> : vector<16x128xf32>
    %3 = tpu.matmul %1, %2, %cst {dimension_numbers = #tpu.dot_dimension_numbers<[1], [0], [0], [1], [0, 0, 1, 1], [], []>} : vector<16x32xbf16>, vector<32x128xbf16>, vector<16x128xf32> -> vector<16x128xf32>
    %c0_3 = arith.constant 0 : index
    %c0_4 = arith.constant 0 : index
    %4 = vector.load %arg3[%c0_3, %c0_4] : memref<1x128xf32, #tpu.memory_space<vmem>>, vector<1x128xf32>
    %5 = vector.broadcast %4 : vector<1x128xf32> to vector<16x128xf32>
    %6 = arith.addf %3, %5 : vector<16x128xf32>
    %cst_5 = arith.constant dense<0xFF800000> : vector<16xf32>
    %7 = vector.multi_reduction <maximumf>, %6, %cst_5 [1] : vector<16x128xf32> to vector<16xf32>
    %8 = vector.shape_cast %7 : vector<16xf32> to vector<16x1xf32>
    %9 = vector.broadcast %8 : vector<16x1xf32> to vector<16x128xf32>
    %10 = arith.subf %6, %9 : vector<16x128xf32>
    %11 = math.exp %10 : vector<16x128xf32>
    %cst_6 = arith.constant dense<0.000000e+00> : vector<16xf32>
    %12 = vector.multi_reduction <add>, %11, %cst_6 [1] : vector<16x128xf32> to vector<16xf32>
    %13 = vector.shape_cast %12 : vector<16xf32> to vector<16x1xf32>
    %14 = tpu.reciprocal %13 {approx = true} : vector<16x1xf32> -> vector<16x1xf32>
    %15 = vector.broadcast %14 : vector<16x1xf32> to vector<16x128xf32>
    %16 = arith.mulf %11, %15 : vector<16x128xf32>
    %17 = arith.truncf %16 : vector<16x128xf32> to vector<16x128xbf16>
    %c0_7 = arith.constant 0 : index
    %c0_8 = arith.constant 0 : index
    %18 = vector.load %arg4[%c0_7, %c0_8] : memref<16x128xbf16, #tpu.memory_space<vmem>>, vector<16x128xbf16>
    tpu.vector_store %arg4[%c0_7, %c0_8], %17 {strides = array<i32>} : memref<16x128xbf16, #tpu.memory_space<vmem>>, vector<16x128xbf16>,
    return
  }
  func.func @transform_0(%arg0: i32) -> (i32, i32) {
    %c0_i32 = arith.constant 0 : i32
    %c0_i32_0 = arith.constant 0 : i32
    return %arg0, %c0_i32 : i32, i32
  }
  func.func @transform_1(%arg0: i32) -> (i32, i32) {
    %c0_i32 = arith.constant 0 : i32
    %c0_i32_0 = arith.constant 0 : i32
    %c0_i32_1 = arith.constant 0 : i32
    return %c0_i32, %c0_i32_0 : i32, i32
  }
  func.func @transform_2(%arg0: i32) -> (i32, i32) {
    %c0_i32 = arith.constant 0 : i32
    %c0_i32_0 = arith.constant 0 : i32
    %c0_i32_1 = arith.constant 0 : i32
    return %c0_i32, %c0_i32_0 : i32, i32
  }
  func.func @transform_3(%arg0: i32) -> (i32, i32) {
    %c0_i32 = arith.constant 0 : i32
    %c0_i32_0 = arith.constant 0 : i32
    return %arg0, %c0_i32 : i32, i32
  }
}

module attributes {stable_mosaic.version = 11 : i64} {
  func.func @_fc_kernel(%arg0: i32, %arg1: memref<16x32xf32, #tpu.memory_space<vmem>>, %arg2: memref<32x128xbf16, #tpu.memory_space<vmem>>, %arg3: memref<1x128xf32, #tpu.memory_space<vmem>>, %arg4: memref<16x128xbf16, #tpu.memory_space<vmem>>) attributes {dimension_semantics = [#tpu.dimension_semantics<parallel>], iteration_bounds = array<i64: 1>, scalar_prefetch = 0 : i64, scratch_operands = 0 : i64, tpu.core_type = #tpu.core_type<tc>, window_params = [{transform_indices = @transform_0, window_bounds = array<i64: 16, 32>}, {pipeline_mode = #tpu.pipeline_mode<synchronous>, transform_indices = @transform_1, window_bounds = array<i64: 32, 128>}, {pipeline_mode = #tpu.pipeline_mode<synchronous>, transform_indices = @transform_2, window_bounds = array<i64: 1, 128>}, {transform_indices = @transform_3, window_bounds = array<i64: 16, 128>}]} {
    %c0 = arith.constant 0 : index
    %c0_0 = arith.constant 0 : index
    %0 = vector.load %arg1[%c0, %c0_0] : memref<16x32xf32, #tpu.memory_space<vmem>>, vector<16x32xf32>
    %1 = arith.truncf %0 : vector<16x32xf32> to vector<16x32xbf16>
    %c0_1 = arith.constant 0 : index
    %c0_2 = arith.constant 0 : index
    %2 = vector.load %arg2[%c0_1, %c0_2] : memref<32x128xbf16, #tpu.memory_space<vmem>>, vector<32x128xbf16>
    %cst = arith.constant dense<0.000000e+00> : vector<16x128xf32>
    %3 = tpu.matmul %1, %2, %cst {dimension_numbers = #tpu.dot_dimension_numbers<[1], [0], [0], [1], [0, 0, 1, 1], [], []>} : vector<16x32xbf16>, vector<32x128xbf16>, vector<16x128xf32> -> vector<16x128xf32>
    %c0_3 = arith.constant 0 : index
    %c0_4 = arith.constant 0 : index
    %4 = vector.load %arg3[%c0_3, %c0_4] : memref<1x128xf32, #tpu.memory_space<vmem>>, vector<1x128xf32>
    %5 = vector.broadcast %4 : vector<1x128xf32> to vector<16x128xf32>
    %6 = arith.addf %3, %5 : vector<16x128xf32>
    %cst_5 = arith.constant dense<0xFF800000> : vector<16xf32>
    %7 = vector.multi_reduction <maximumf>, %6, %cst_5 [1] : vector<16x128xf32> to vector<16xf32>
    %8 = vector.shape_cast %7 : vector<16xf32> to vector<16x1xf32>
    %9 = vector.broadcast %8 : vector<16x1xf32> to vector<16x128xf32>
    %10 = arith.subf %6, %9 : vector<16x128xf32>
    %11 = math.exp %10 : vector<16x128xf32>
    %cst_6 = arith.constant dense<0.000000e+00> : vector<16xf32>
    %12 = vector.multi_reduction <add>, %11, %cst_6 [1] : vector<16x128xf32> to vector<16xf32>
    %13 = vector.shape_cast %12 : vector<16xf32> to vector<16x1xf32>
    %14 = tpu.reciprocal %13 {approx = true} : vector<16x1xf32> -> vector<16x1xf32>
    %15 = vector.broadcast %14 : vector<16x1xf32> to vector<16x128xf32>
    %16 = arith.mulf %11, %15 : vector<16x128xf32>
    %17 = arith.truncf %16 : vector<16x128xf32> to vector<16x128xbf16>
    %c0_7 = arith.constant 0 : index
    %c0_8 = arith.constant 0 : index
    %18 = vector.load %arg4[%c0_7, %c0_8] : memref<16x128xbf16, #tpu.memory_space<vmem>>, vector<16x128xbf16>
    tpu.vector_store %arg4[%c0_7, %c0_8], %17 {strides = array<i32>} : memref<16x128xbf16, #tpu.memory_space<vmem>>, vector<16x128xbf16>,
    return
  }
  func.func @transform_0(%arg0: i32) -> (i32, i32) {
    %c0_i32 = arith.constant 0 : i32
    %c0_i32_0 = arith.constant 0 : i32
    return %arg0, %c0_i32 : i32, i32
  }
  func.func @transform_1(%arg0: i32) -> (i32, i32) {
    %c0_i32 = arith.constant 0 : i32
    %c0_i32_0 = arith.constant 0 : i32
    %c0_i32_1 = arith.constant 0 : i32
    return %c0_i32, %c0_i32_0 : i32, i32
  }
  func.func @transform_2(%arg0: i32) -> (i32, i32) {
    %c0_i32 = arith.constant 0 : i32
    %c0_i32_0 = arith.constant 0 : i32
    %c0_i32_1 = arith.constant 0 : i32
    return %c0_i32, %c0_i32_0 : i32, i32
  }
  func.func @transform_3(%arg0: i32) -> (i32, i32) {
    %c0_i32 = arith.constant 0 : i32
    %c0_i32_0 = arith.constant 0 : i32
    return %arg0, %c0_i32 : i32, i32
  }
}

</mosaic_0001>

<llo_original>
// kernel: tpu_custom_call.1
$region0: #{tpu_custom_call.1}
  #allocation0 [shape = 'u32[]', space=smem, size = 0x4, offset = 0x4, fixed_abs, tag = 'smem constant byte address 0x4 - core index']
  #allocation1 [shape = 'u32[144,128]{1,0:T(1,128)}', space=vmem, size = 0x12000, scoped, tag = 'internal scratch']
  %s0 = inlined_call_operand.hbm [shape: f32[16,32], index: 0, kind: input, shape index: {}]
  %s1 = inlined_call_operand.hbm [shape: bf16[32,128], index: 1, kind: input, shape index: {}]
  %s2 = inlined_call_operand.vmem [shape: f32[1,128], index: 2, kind: input, shape index: {}]
  %s3 = inlined_call_operand.hbm [shape: bf16[16,128], index: 3, kind: output, shape index: {}]
  %s4 = sld [smem:[#allocation0]]
  $region30: #{tpu_custom_call.1} parent=0
    _
  %s6 = ssub.s32 1, %s4
  %s7 = scalar_select 0, %s6, %s4
  $region1: #{tpu_custom_call.1} parent=0
    #allocation2 [shape = 'u8[8192]{0}', space=vmem, size = 0x2000, scoped, tag = 'input window, operand 0, single buffered']
    #allocation3 [shape = 's32[1]{0}', space=sflag, size = 0x4, scoped, tag = 'scoped memory for tpu_custom_call.1']
    #allocation4 [shape = 's32[1]{0}', space=sflag, size = 0x4, scoped, tag = 'scoped memory for tpu_custom_call.1']
    #allocation5 [shape = 'u8[8192]{0}', space=vmem, size = 0x2000, scoped, tag = 'input window, operand 1, single buffered']
    #allocation6 [shape = 's32[1]{0}', space=sflag, size = 0x4, scoped, tag = 'scoped memory for tpu_custom_call.1']
    #allocation7 [shape = 'u8[4096]{0}', space=vmem, size = 0x1000, scoped, tag = 'output window, operand 0, single buffered']
    %8 = vsyncpa [#allocation3], 0
    %9 = vsyncpa [#allocation6], 0
    %10 = vsyncpa [#allocation4], 0
    // Predicated region
    $region2: #{tpu_custom_call.1} parent=1 // pred_check
      _
    $region3: #{tpu_custom_call.1} parent=1 // pred_check_branch
      %12 = sbr.rel (0) target = $region5
    $region4: #{tpu_custom_call.1} parent=1 // pred_region
      %s14 = ssub.s32 256, 256
      %15 = vsyncadd [#allocation3], %s14
      %s16 = sshll.u32 [#allocation2], 4
      %s17 = int_to_ptr.vmem [resolvable:$true] %s16
      %22 = dma.hbm_to_vmem [thread:$0]  %s0, 256, %s17, [#allocation3], 128, 128, 8
    $region5: #{tpu_custom_call.1} parent=1 // pred_fallthru
      _
    // Predicated region
    $region6: #{tpu_custom_call.1} parent=1 // pred_check
      _
    $region7: #{tpu_custom_call.1} parent=1 // pred_check_branch
      %24 = sbr.rel (0) target = $region9
    $region8: #{tpu_custom_call.1} parent=1 // pred_region
      %s26 = ssub.s32 256, 256
      %27 = vsyncadd [#allocation6], %s26
      %s28 = sshll.u32 [#allocation5], 4
      %s29 = int_to_ptr.vmem [resolvable:$true] %s28
      %34 = dma.hbm_to_vmem [thread:$0]  %s1, 256, %s29, [#allocation6], 64, 64, 4
    $region9: #{tpu_custom_call.1} parent=1 // pred_fallthru
      _
    // Predicated region
    $region10: #{tpu_custom_call.1} parent=1 // pred_check
      _
    $region11: #{tpu_custom_call.1} parent=1 // pred_check_branch
      %36 = sbr.rel (0) target = $region13
    $region12: #{tpu_custom_call.1} parent=1 // pred_region
      _
    $region13: #{tpu_custom_call.1} parent=1 // pred_fallthru
      _
    // Predicated region
    $region14: #{tpu_custom_call.1} parent=1 // pred_check
      _
    $region15: #{tpu_custom_call.1} parent=1 // pred_check_branch
      %38 = sbr.rel (0) target = $region17
    $region16: #{tpu_custom_call.1} parent=1 // pred_region
      %39 = dma.done [#allocation3], 256
    $region17: #{tpu_custom_call.1} parent=1 // pred_fallthru
      _
    // Predicated region
    $region18: #{tpu_custom_call.1} parent=1 // pred_check
      _
    $region19: #{tpu_custom_call.1} parent=1 // pred_check_branch
      %41 = sbr.rel (0) target = $region21
    $region20: #{tpu_custom_call.1} parent=1 // pred_region
      %42 = dma.done [#allocation6], 256
    $region21: #{tpu_custom_call.1} parent=1 // pred_fallthru
      _
    %v44 = vld [vmem:[#allocation2] sm:$0xff]
    %v45 = vld [vmem:[#allocation2 + $0x8] sm:$0xff]
    %v46 = vpack.c.bf16 %v45, %v44
    %v47 = vld [vmem:[#allocation5] sm:$0xf]
    %v48 = vld [vmem:[#allocation5 + $0x4] sm:$0xf]
    %v49 = vld [vmem:[#allocation5 + $0x8] sm:$0xf]
    %v50 = vld [vmem:[#allocation5 + $0xc] sm:$0xf]
    %v51 = vld [vmem:[%s2] sm:$0x1]
    %v53 = vlaneseq
    %v54 = vshrl.u32 %v53, 7
    %v55 = vsub.s32 0, %v54
    %v56 = vrot.slane %v51, %v55
    %v62 = vunpack.c.l.b16 %v47
    %v63 = vunpack.c.l.b16 %v48
    %v64 = vunpack.c.l.b16 %v49
    %v65 = vunpack.c.l.b16 %v50
    %v66 = vpack.c.b16 %v63, %v62
    %v67 = vpack.c.b16 %v65, %v64
    %vm70 = vcmask 261120
    %v72 = vsel %vm70, %v46, 0
    %74 = vmatprep.subr.bf16.mxu0 0
    %75 = vmatpush1.bf16.msra.mxu0 0
    %76 = vmatprep.subr.bf16.mxu0 0
    %77 = vmatpush1.bf16.msra.mxu0 0
    %78 = vmatprep.subr.bf16.mxu0 0
    %79 = vmatpush1.bf16.msra.mxu0 0
    %80 = vmatprep.subr.bf16.mxu0 0
    %81 = vmatpush1.bf16.msra.mxu0 0
    %82 = vmatprep.subr.bf16.mxu0 0
    %83 = vmatpush1.bf16.msra.mxu0 0
    %84 = vmatprep.subr.bf16.mxu0 0
    %85 = vmatpush1.bf16.msra.mxu0 0
    %86 = vmatprep.subr.bf16.mxu0 0
    %87 = vmatpush1.bf16.msra.mxu0 %v67
    %88 = vmatprep.subr.bf16.mxu0 0
    %89 = vmatpush1.bf16.msra.mxu0 %v66
    %90 = vmatprep.subr.bf16.mxu0 0
    %91 = vmatpush2.bf16.msra.mxu0 0
    %92 = vmatprep.subr.bf16.mxu0 0
    %93 = vmatpush2.bf16.msra.mxu0 0
    %94 = vmatprep.subr.bf16.mxu0 0
    %95 = vmatpush2.bf16.msra.mxu0 0
    %96 = vmatprep.subr.bf16.mxu0 0
    %97 = vmatpush2.bf16.msra.mxu0 0
    %98 = vmatprep.subr.bf16.mxu0 0
    %99 = vmatpush2.bf16.msra.mxu0 0
    %100 = vmatprep.subr.bf16.mxu0 0
    %101 = vmatpush2.bf16.msra.mxu0 0
    %102 = vmatprep.subr.bf16.mxu0 0
    %103 = vmatpush2.bf16.msra.mxu0 0
    %104 = vmatprep.subr.bf16.mxu0 0
    %105 = vmatpush2.bf16.msra.mxu0 0
    %106 = vmatprep.mubr.bf16.mxu0 0
    %107 = vmatmul.mubr.bf16.gmra.mxu0 %v72
    %v108 = vpop.f32.mrf.mxu0
    %v109 = vadd.f32 %v56, %v108
    %v110 = vpop.f32.mrf.mxu0
    %v111 = vpop.f32.mrf.mxu0
    %v112 = vadd.f32 %v56, %v111
    %v113 = vpop.f32.mrf.mxu0
    %114 = vdwg.mxu0
    %115 = vmax.xlane.f32.xlu0 %v109
    %v116 = vpop.xlane.xlu0 %115
    %117 = vmax.xlane.f32.xlu0 %v112
    %v118 = vpop.xlane.xlu0 %117
    %v119 = vsub.f32 %v109, %v116
    %v120 = vsub.f32 %v112, %v118
    %v121 = vmul.f32 %v119, 1.442695
    %v122 = vpow.pop %v121
    %v123 = vmul.f32 %v120, 1.442695
    %v124 = vpow.pop %v123
    %125 = vadd.xlane.f32.xlu0 %v122
    %v126 = vpop.xlane.xlu0 %125
    %127 = vadd.xlane.f32.xlu0 %v124
    %v128 = vpop.xlane.xlu0 %127
    %v129 = vrcp.pop %v126
    %v130 = vrcp.pop %v128
    %v131 = vmul.f32 %v122, %v129
    %v132 = vmul.f32 %v124, %v130
    %v133 = vpack.c.bf16 %v132, %v131
    %v135 = vunpack.c.l.b16 %v133
    %v136 = vunpack.c.h.b16 %v133
    %v137 = vpack.c.b16 %v135, %v135
    %v138 = vpack.c.b16 %v136, %v136
    %141 = vst [vmem:[#allocation7] sm:$0xf] %v137
    %142 = vst [vmem:[#allocation7 + $0x4] sm:$0xf] %v138
    // Predicated region
    $region22: #{tpu_custom_call.1} parent=1 // pred_check
      _
    $region23: #{tpu_custom_call.1} parent=1 // pred_check_branch
      %144 = sbr.rel (0) target = $region25
    $region24: #{tpu_custom_call.1} parent=1 // pred_region
      %s146 = ssub.s32 128, 128
      %147 = vsyncadd [#allocation4], %s146
      %s148 = sshll.u32 [#allocation7], 4
      %s149 = int_to_ptr.vmem [resolvable:$true] %s148
      %154 = dma.vmem_to_hbm [thread:$0]  %s149, 128, %s3, [#allocation4], 64, 64, 4
    $region25: #{tpu_custom_call.1} parent=1 // pred_fallthru
      _
    // Predicated region
    $region26: #{tpu_custom_call.1} parent=1 // pred_check
      _
    $region27: #{tpu_custom_call.1} parent=1 // pred_check_branch
      %156 = sbr.rel (0) target = $region29
    $region28: #{tpu_custom_call.1} parent=1 // pred_region
      %157 = dma.done [#allocation4], 128
    $region29: #{tpu_custom_call.1} parent=1 // pred_fallthru
      _
    %158 = vsyncpa [#allocation3], 1
    %159 = vsyncpa [#allocation6], 1
    %160 = vsyncpa [#allocation4], 1

// kernel: tpu_custom_call.1
$region0: #{tpu_custom_call.1}
  #allocation0 [shape = 'u32[]', space=smem, size = 0x4, offset = 0x4, fixed_abs, tag = 'smem constant byte address 0x4 - core index']
  #allocation1 [shape = 'u32[144,128]{1,0:T(1,128)}', space=vmem, size = 0x12000, scoped, tag = 'internal scratch']
  %s0 = inlined_call_operand.hbm [shape: f32[16,32], index: 0, kind: input, shape index: {}]
  %s1 = inlined_call_operand.hbm [shape: bf16[32,128], index: 1, kind: input, shape index: {}]
  %s2 = inlined_call_operand.vmem [shape: f32[1,128], index: 2, kind: input, shape index: {}]
  %s3 = inlined_call_operand.hbm [shape: bf16[16,128], index: 3, kind: output, shape index: {}]
  %s4 = sld [smem:[#allocation0]]
  $region30: #{tpu_custom_call.1} parent=0
    _
  %s6 = ssub.s32 1, %s4
  %s7 = scalar_select 0, %s6, %s4
  $region1: #{tpu_custom_call.1} parent=0
    #allocation2 [shape = 'u8[8192]{0}', space=vmem, size = 0x2000, scoped, tag = 'input window, operand 0, single buffered']
    #allocation3 [shape = 's32[1]{0}', space=sflag, size = 0x4, scoped, tag = 'scoped memory for tpu_custom_call.1']
    #allocation4 [shape = 's32[1]{0}', space=sflag, size = 0x4, scoped, tag = 'scoped memory for tpu_custom_call.1']
    #allocation5 [shape = 'u8[8192]{0}', space=vmem, size = 0x2000, scoped, tag = 'input window, operand 1, single buffered']
    #allocation6 [shape = 's32[1]{0}', space=sflag, size = 0x4, scoped, tag = 'scoped memory for tpu_custom_call.1']
    #allocation7 [shape = 'u8[4096]{0}', space=vmem, size = 0x1000, scoped, tag = 'output window, operand 0, single buffered']
    %8 = vsyncpa [#allocation3], 0
    %9 = vsyncpa [#allocation6], 0
    %10 = vsyncpa [#allocation4], 0
    // Predicated region
    $region2: #{tpu_custom_call.1} parent=1 // pred_check
      _
    $region3: #{tpu_custom_call.1} parent=1 // pred_check_branch
      %12 = sbr.rel (0) target = $region5
    $region4: #{tpu_custom_call.1} parent=1 // pred_region
      %s14 = ssub.s32 256, 256
      %15 = vsyncadd [#allocation3], %s14
      %s16 = sshll.u32 [#allocation2], 4
      %s17 = int_to_ptr.vmem [resolvable:$true] %s16
      %22 = dma.hbm_to_vmem [thread:$0]  %s0, 256, %s17, [#allocation3], 128, 128, 8
    $region5: #{tpu_custom_call.1} parent=1 // pred_fallthru
      _
    // Predicated region
    $region6: #{tpu_custom_call.1} parent=1 // pred_check
      _
    $region7: #{tpu_custom_call.1} parent=1 // pred_check_branch
      %24 = sbr.rel (0) target = $region9
    $region8: #{tpu_custom_call.1} parent=1 // pred_region
      %s26 = ssub.s32 256, 256
      %27 = vsyncadd [#allocation6], %s26
      %s28 = sshll.u32 [#allocation5], 4
      %s29 = int_to_ptr.vmem [resolvable:$true] %s28
      %34 = dma.hbm_to_vmem [thread:$0]  %s1, 256, %s29, [#allocation6], 64, 64, 4
    $region9: #{tpu_custom_call.1} parent=1 // pred_fallthru
      _
    // Predicated region
    $region10: #{tpu_custom_call.1} parent=1 // pred_check
      _
    $region11: #{tpu_custom_call.1} parent=1 // pred_check_branch
      %36 = sbr.rel (0) target = $region13
    $region12: #{tpu_custom_call.1} parent=1 // pred_region
      _
    $region13: #{tpu_custom_call.1} parent=1 // pred_fallthru
      _
    // Predicated region
    $region14: #{tpu_custom_call.1} parent=1 // pred_check
      _
    $region15: #{tpu_custom_call.1} parent=1 // pred_check_branch
      %38 = sbr.rel (0) target = $region17
    $region16: #{tpu_custom_call.1} parent=1 // pred_region
      %39 = dma.done [#allocation3], 256
    $region17: #{tpu_custom_call.1} parent=1 // pred_fallthru
      _
    // Predicated region
    $region18: #{tpu_custom_call.1} parent=1 // pred_check
      _
    $region19: #{tpu_custom_call.1} parent=1 // pred_check_branch
      %41 = sbr.rel (0) target = $region21
    $region20: #{tpu_custom_call.1} parent=1 // pred_region
      %42 = dma.done [#allocation6], 256
    $region21: #{tpu_custom_call.1} parent=1 // pred_fallthru
      _
    %v44 = vld [vmem:[#allocation2] sm:$0xff]
    %v45 = vld [vmem:[#allocation2 + $0x8] sm:$0xff]
    %v46 = vpack.c.bf16 %v45, %v44
    %v47 = vld [vmem:[#allocation5] sm:$0xf]
    %v48 = vld [vmem:[#allocation5 + $0x4] sm:$0xf]
    %v49 = vld [vmem:[#allocation5 + $0x8] sm:$0xf]
    %v50 = vld [vmem:[#allocation5 + $0xc] sm:$0xf]
    %v51 = vld [vmem:[%s2] sm:$0x1]
    %v53 = vlaneseq
    %v54 = vshrl.u32 %v53, 7
    %v55 = vsub.s32 0, %v54
    %v56 = vrot.slane %v51, %v55
    %v62 = vunpack.c.l.b16 %v47
    %v63 = vunpack.c.l.b16 %v48
    %v64 = vunpack.c.l.b16 %v49
    %v65 = vunpack.c.l.b16 %v50
    %v66 = vpack.c.b16 %v63, %v62
    %v67 = vpack.c.b16 %v65, %v64
    %vm70 = vcmask 261120
    %v72 = vsel %vm70, %v46, 0
    %74 = vmatprep.subr.bf16.mxu0 0
    %75 = vmatpush1.bf16.msra.mxu0 0
    %76 = vmatprep.subr.bf16.mxu0 0
    %77 = vmatpush1.bf16.msra.mxu0 0
    %78 = vmatprep.subr.bf16.mxu0 0
    %79 = vmatpush1.bf16.msra.mxu0 0
    %80 = vmatprep.subr.bf16.mxu0 0
    %81 = vmatpush1.bf16.msra.mxu0 0
    %82 = vmatprep.subr.bf16.mxu0 0
    %83 = vmatpush1.bf16.msra.mxu0 0
    %84 = vmatprep.subr.bf16.mxu0 0
    %85 = vmatpush1.bf16.msra.mxu0 0
    %86 = vmatprep.subr.bf16.mxu0 0
    %87 = vmatpush1.bf16.msra.mxu0 %v67
    %88 = vmatprep.subr.bf16.mxu0 0
    %89 = vmatpush1.bf16.msra.mxu0 %v66
    %90 = vmatprep.subr.bf16.mxu0 0
    %91 = vmatpush2.bf16.msra.mxu0 0
    %92 = vmatprep.subr.bf16.mxu0 0
    %93 = vmatpush2.bf16.msra.mxu0 0
    %94 = vmatprep.subr.bf16.mxu0 0
    %95 = vmatpush2.bf16.msra.mxu0 0
    %96 = vmatprep.subr.bf16.mxu0 0
    %97 = vmatpush2.bf16.msra.mxu0 0
    %98 = vmatprep.subr.bf16.mxu0 0
    %99 = vmatpush2.bf16.msra.mxu0 0
    %100 = vmatprep.subr.bf16.mxu0 0
    %101 = vmatpush2.bf16.msra.mxu0 0
    %102 = vmatprep.subr.bf16.mxu0 0
    %103 = vmatpush2.bf16.msra.mxu0 0
    %104 = vmatprep.subr.bf16.mxu0 0
    %105 = vmatpush2.bf16.msra.mxu0 0
    %106 = vmatprep.mubr.bf16.mxu0 0
    %107 = vmatmul.mubr.bf16.gmra.mxu0 %v72
    %v108 = vpop.f32.mrf.mxu0
    %v109 = vadd.f32 %v56, %v108
    %v110 = vpop.f32.mrf.mxu0
    %v111 = vpop.f32.mrf.mxu0
    %v112 = vadd.f32 %v56, %v111
    %v113 = vpop.f32.mrf.mxu0
    %114 = vdwg.mxu0
    %115 = vmax.xlane.f32.xlu0 %v109
    %v116 = vpop.xlane.xlu0 %115
    %117 = vmax.xlane.f32.xlu0 %v112
    %v118 = vpop.xlane.xlu0 %117
    %v119 = vsub.f32 %v109, %v116
    %v120 = vsub.f32 %v112, %v118
    %v121 = vmul.f32 %v119, 1.442695
    %v122 = vpow.pop %v121
    %v123 = vmul.f32 %v120, 1.442695
    %v124 = vpow.pop %v123
    %125 = vadd.xlane.f32.xlu0 %v122
    %v126 = vpop.xlane.xlu0 %125
    %127 = vadd.xlane.f32.xlu0 %v124
    %v128 = vpop.xlane.xlu0 %127
    %v129 = vrcp.pop %v126
    %v130 = vrcp.pop %v128
    %v131 = vmul.f32 %v122, %v129
    %v132 = vmul.f32 %v124, %v130
    %v133 = vpack.c.bf16 %v132, %v131
    %v135 = vunpack.c.l.b16 %v133
    %v136 = vunpack.c.h.b16 %v133
    %v137 = vpack.c.b16 %v135, %v135
    %v138 = vpack.c.b16 %v136, %v136
    %141 = vst [vmem:[#allocation7] sm:$0xf] %v137
    %142 = vst [vmem:[#allocation7 + $0x4] sm:$0xf] %v138
    // Predicated region
    $region22: #{tpu_custom_call.1} parent=1 // pred_check
      _
    $region23: #{tpu_custom_call.1} parent=1 // pred_check_branch
      %144 = sbr.rel (0) target = $region25
    $region24: #{tpu_custom_call.1} parent=1 // pred_region
      %s146 = ssub.s32 128, 128
      %147 = vsyncadd [#allocation4], %s146
      %s148 = sshll.u32 [#allocation7], 4
      %s149 = int_to_ptr.vmem [resolvable:$true] %s148
      %154 = dma.vmem_to_hbm [thread:$0]  %s149, 128, %s3, [#allocation4], 64, 64, 4
    $region25: #{tpu_custom_call.1} parent=1 // pred_fallthru
      _
    // Predicated region
    $region26: #{tpu_custom_call.1} parent=1 // pred_check
      _
    $region27: #{tpu_custom_call.1} parent=1 // pred_check_branch
      %156 = sbr.rel (0) target = $region29
    $region28: #{tpu_custom_call.1} parent=1 // pred_region
      %157 = dma.done [#allocation4], 128
    $region29: #{tpu_custom_call.1} parent=1 // pred_fallthru
      _
    %158 = vsyncpa [#allocation3], 1
    %159 = vsyncpa [#allocation6], 1
    %160 = vsyncpa [#allocation4], 1

</llo_original>
